<compile_context>
chip_gen: v5e
topology: v5e:2x2
jax: 0.10.0
libtpu: 0.0.40
codegen_flags: <defaults>
</compile_context>

<pallas_src>
import functools

import jax
import jax.numpy as jnp
from jax import lax
from jax.experimental import pallas as pl
from jax.experimental.pallas import tpu as pltpu


def _vmem_capacity_bytes():
    try:
        info = pltpu.get_tpu_info()
        cap = getattr(info, "vmem_capacity_bytes", None)
        if cap:
            return int(cap)
    except Exception:
        pass
    return 64 << 20  # conservative default (v7x per-core VMEM)


def _pick_tm(b, d, itemsize):
    """VMEM- and generation-aware row-tile size (multiple of 8)."""
    vmem_cap = _vmem_capacity_bytes()
    # Budget left after the single-buffered resident (2B, D) column operand.
    budget = int(0.7 * vmem_cap) - 2 * b * d * itemsize
    # ~6 live f32 (tm, 2B) intermediates (two halves x logits / exp / select temps).
    per_row_bytes = 6 * (2 * b) * 4
    tm_cap = max(8, budget // max(per_row_bytes, 1))
    tm = 8
    for t in (8, 16, 32, 64, 128, 256, 512, 1024):
        # Keep at least 2 row blocks when the batch allows it (v7x: both TCs busy).
        if t <= tm_cap and t <= max(b // 2, 8):
            tm = t
    return tm


def _sscl_kernel(feats_ref, o_ref, *, temperature, b, b_pad, tm):
    # feats_ref: (2*b_pad, D) fully resident concat of [f1_pad; f2_pad].
    # o_ref:     (tm, 2) per-row losses (col 0 = top-half row, col 1 = bottom-half row).
    inv_t = 1.0 / float(temperature)
    c = feats_ref.shape[0]  # 2 * b_pad
    row0 = pl.multiple_of(pl.program_id(0) * tm, tm)

    feats = feats_ref[...]                          # resident column operand
    f1r = feats_ref[pl.ds(row0, tm), :]             # (tm, D) top-half rows
    f2r = feats_ref[pl.ds(b_pad + row0, tm), :]     # (tm, D) bottom-half rows

    # Two (tm, D) x (D, 2*b_pad) matmuls on the MXU, f32 accumulation.
    dn = (((1,), (1,)), ((), ()))
    s_top = lax.dot_general(f1r, feats, dn, preferred_element_type=jnp.float32) * inv_t
    s_bot = lax.dot_general(f2r, feats, dn, preferred_element_type=jnp.float32) * inv_t

    col = lax.broadcasted_iota(jnp.int32, (tm, c), 1)
    g = lax.broadcasted_iota(jnp.int32, (tm, c), 0) + row0

    # Excluded entries of the implicit 2Bx2B matrix are the block diagonals;
    # the same compare covers the top and bottom half rows of index g.
    diag = (col == g) | (col == g + b_pad)
    if b != b_pad:
        # Mask out padded feature columns too (zero rows added by the wrapper).
        valid = (col < b) | ((col >= b_pad) & (col < b_pad + b))
        keep = valid & jnp.logical_not(diag)
    else:
        keep = jnp.logical_not(diag)

    # Positive logit (f1_i . f2_i)/T, reused from the already-computed f1@f2 diagonal.
    logit_pos = jnp.sum(jnp.where(col == g + b_pad, s_top, 0.0),
                        axis=-1, keepdims=True)                       # (tm, 1)

    # Log-sum-exp stabilization: any per-row shift is exact; the row max keeps exp finite.
    m_top = jnp.maximum(jnp.max(s_top, axis=-1, keepdims=True), logit_pos)
    m_bot = jnp.maximum(jnp.max(s_bot, axis=-1, keepdims=True), logit_pos)

    neg_top = jnp.sum(jnp.where(keep, jnp.exp(s_top - m_top), 0.0),
                      axis=-1, keepdims=True)
    neg_bot = jnp.sum(jnp.where(keep, jnp.exp(s_bot - m_bot), 0.0),
                      axis=-1, keepdims=True)

    pos_top = jnp.exp(logit_pos - m_top)
    pos_bot = jnp.exp(logit_pos - m_bot)

    # -log(pos / (pos + neg)) == log(pos' + neg') + m - logit_pos
    loss_top = jnp.log(pos_top + neg_top) + m_top - logit_pos
    loss_bot = jnp.log(pos_bot + neg_bot) + m_bot - logit_pos

    o_ref[:, 0:1] = loss_top.astype(o_ref.dtype)
    o_ref[:, 1:2] = loss_bot.astype(o_ref.dtype)


def _make_call(dtype, tm, b, b_pad, d, temperature, vmem_limit, buffered):
    c = 2 * b_pad
    if buffered:
        # The resident operand's block index never changes: single-buffer it.
        col_spec = pl.BlockSpec((c, d), lambda i: (0, 0), pipeline_mode=pl.Buffered(1))
    else:
        col_spec = pl.BlockSpec((c, d), lambda i: (0, 0))

    kernel = functools.partial(
        _sscl_kernel, temperature=float(temperature), b=b, b_pad=b_pad, tm=tm
    )
    itemsize = jnp.dtype(dtype).itemsize
    cost = pl.CostEstimate(
        flops=int(8 * b_pad * b_pad * d),
        transcendentals=int(4 * b_pad * b_pad + 4 * b_pad),
        bytes_accessed=int(c * d * itemsize + b_pad * 2 * 4),
    )
    return pl.pallas_call(
        kernel,
        out_shape=jax.ShapeDtypeStruct((b_pad, 2), jnp.float32),
        grid=(b_pad // tm,),
        in_specs=[col_spec],
        out_specs=pl.BlockSpec((tm, 2), lambda i: (i, 0)),
        compiler_params=pltpu.CompilerParams(
            dimension_semantics=("parallel",),  # row blocks are independent
            vmem_limit_bytes=int(vmem_limit),
        ),
        cost_estimate=cost,
    )


def sscl_pair_con_loss(feature1, feature2, temperature=0.05):
    """Pallas implementation of SSCL_PairConLoss.forward. Returns a scalar f32."""
    assert feature1.shape == feature2.shape, (
        "There is the wrong shape between the two input tensors in SSCL!"
    )
    B, D = feature1.shape
    itemsize = jnp.dtype(feature1.dtype).itemsize

    tm = _pick_tm(B, D, itemsize)
    b_pad = pl.cdiv(B, tm) * tm
    if b_pad != B:
        pad = b_pad - B
        f1 = jnp.pad(feature1, ((0, pad), (0, 0)))
        f2 = jnp.pad(feature2, ((0, pad), (0, 0)))
    else:
        f1, f2 = feature1, feature2
    feats = jnp.concatenate([f1, f2], axis=0)  # (2*b_pad, D)

    vmem_limit = int(0.9 * _vmem_capacity_bytes())

    def run(buffered):
        return _make_call(feature1.dtype, tm, B, b_pad, D,
                          temperature, vmem_limit, buffered)(feats)

    try:
        per_row = run(True)
    except Exception:
        # This JAX build rejected pl.Buffered(1); fall back to default pipelining.
        per_row = run(False)

    # Drop padded output rows; tiny final reduction over 2B per-row losses.
    return jnp.mean(per_row[:B])


def _reference_loss(feature1, feature2, temperature=0.05):
    """Pure-JAX reference mirroring the PyTorch forward exactly."""
    b = feature1.shape[0]
    feats = jnp.concatenate([feature1, feature2], axis=0)
    mask = jnp.tile(jnp.eye(b, dtype=bool), (2, 2))
    keep = ~mask
    pos = jnp.exp(jnp.sum(feature1 * feature2, axis=-1) / temperature)
    pos = jnp.concatenate([pos, pos], axis=0)
    all_pairs = jnp.exp(feats @ feats.T / temperature)
    neg = jnp.sum(jnp.where(keep, all_pairs, 0.0), axis=-1)
    return jnp.mean(-jnp.log(pos / (pos + neg)))


if __name__ == "__main__":
    key = jax.random.PRNGKey(0)
    k1, k2 = jax.random.split(key)

    batch, dim = 8, 32
    f1 = jax.random.normal(k1, (batch, dim), dtype=jnp.float32)
    f2 = jax.random.normal(k2, (batch, dim), dtype=jnp.float32)
    # L2-normalize rows (standard for contrastive features); with T=0.05,
    # unnormalized random inputs overflow exp() in the PyTorch-style reference.
    f1 = f1 / jnp.linalg.norm(f1, axis=-1, keepdims=True)
    f2 = f2 / jnp.linalg.norm(f2, axis=-1, keepdims=True)

    loss = jax.block_until_ready(sscl_pair_con_loss(f1, f2, temperature=0.05))
    ref = jax.block_until_ready(_reference_loss(f1, f2, temperature=0.05))
    assert jnp.isfinite(loss), loss
    assert jnp.allclose(loss, ref, rtol=1e-4, atol=1e-4), (loss, ref)

    # Ragged batch: exercises the row-padding + padded-column masking path.
    g1, g2 = f1[:6], f2[:6]
    loss2 = jax.block_until_ready(sscl_pair_con_loss(g1, g2, temperature=0.05))
    ref2 = jax.block_until_ready(_reference_loss(g1, g2, temperature=0.05))
    assert jnp.isfinite(loss2), loss2
    assert jnp.allclose(loss2, ref2, rtol=1e-4, atol=1e-4), (loss2, ref2)

    print("KERNEL_OK")
</pallas_src>

<mosaic_0001>
module attributes {stable_mosaic.version = 11 : i64} {
  func.func @_sscl_kernel(%arg0: i32, %arg1: memref<16x32xf32, #tpu.memory_space<vmem>>, %arg2: memref<8x2xf32, #tpu.memory_space<vmem>>) attributes {dimension_semantics = [#tpu.dimension_semantics<parallel>], iteration_bounds = array<i64: 1>, scalar_prefetch = 0 : i64, scratch_operands = 0 : i64, tpu.core_type = #tpu.core_type<tc>, window_params = [{pipeline_mode = #tpu.pipeline_mode<synchronous>, transform_indices = @transform_0, window_bounds = array<i64: 16, 32>}, {transform_indices = @transform_1, window_bounds = array<i64: 8, 2>}]} {
    %c8_i32 = arith.constant 8 : i32
    %0 = arith.muli %arg0, %c8_i32 : i32
    %1 = tpu.assume_multiple %0, 8 : i32
    %c0 = arith.constant 0 : index
    %c0_0 = arith.constant 0 : index
    %2 = vector.load %arg1[%c0, %c0_0] : memref<16x32xf32, #tpu.memory_space<vmem>>, vector<16x32xf32>
    %3 = arith.index_cast %1 : i32 to index
    %c0_1 = arith.constant 0 : index
    %4 = vector.load %arg1[%3, %c0_1] : memref<16x32xf32, #tpu.memory_space<vmem>>, vector<8x32xf32>
    %c8_i32_2 = arith.constant 8 : i32
    %5 = arith.addi %c8_i32_2, %1 : i32
    %6 = arith.index_cast %5 : i32 to index
    %c0_3 = arith.constant 0 : index
    %7 = vector.load %arg1[%6, %c0_3] : memref<16x32xf32, #tpu.memory_space<vmem>>, vector<8x32xf32>
    %cst = arith.constant dense<0.000000e+00> : vector<8x16xf32>
    %8 = tpu.matmul %4, %2, %cst {dimension_numbers = #tpu.dot_dimension_numbers<[1], [1], [0], [0], [0, 0, 1, 0], [], []>} : vector<8x32xf32>, vector<16x32xf32>, vector<8x16xf32> -> vector<8x16xf32>
    %cst_4 = arith.constant 2.000000e+01 : f32
    %9 = vector.broadcast %cst_4 : f32 to vector<8x16xf32>
    %10 = arith.mulf %8, %9 : vector<8x16xf32>
    %cst_5 = arith.constant dense<0.000000e+00> : vector<8x16xf32>
    %11 = tpu.matmul %7, %2, %cst_5 {dimension_numbers = #tpu.dot_dimension_numbers<[1], [1], [0], [0], [0, 0, 1, 0], [], []>} : vector<8x32xf32>, vector<16x32xf32>, vector<8x16xf32> -> vector<8x16xf32>
    %cst_6 = arith.constant 2.000000e+01 : f32
    %12 = vector.broadcast %cst_6 : f32 to vector<8x16xf32>
    %13 = arith.mulf %11, %12 : vector<8x16xf32>
    %14 = tpu.iota {dimensions = array<i32: 1>} : vector<8x16xi32>
    %15 = tpu.iota {dimensions = array<i32: 0>} : vector<8x16xi32>
    %16 = vector.broadcast %1 : i32 to vector<8x16xi32>
    %17 = arith.addi %15, %16 : vector<8x16xi32>
    %18 = arith.cmpi eq, %14, %17 : vector<8x16xi32>
    %c8_i32_7 = arith.constant 8 : i32
    %19 = vector.broadcast %c8_i32_7 : i32 to vector<8x16xi32>
    %20 = arith.addi %17, %19 : vector<8x16xi32>
    %21 = arith.cmpi eq, %14, %20 : vector<8x16xi32>
    %22 = arith.ori %18, %21 : vector<8x16xi1>
    %cst_8 = arith.constant dense<true> : vector<8x16xi1>
    %23 = arith.xori %22, %cst_8 : vector<8x16xi1>
    %c8_i32_9 = arith.constant 8 : i32
    %24 = vector.broadcast %c8_i32_9 : i32 to vector<8x16xi32>
    %25 = arith.addi %17, %24 : vector<8x16xi32>
    %26 = arith.cmpi eq, %14, %25 : vector<8x16xi32>
    %cst_10 = arith.constant 0.000000e+00 : f32
    %27 = vector.broadcast %cst_10 : f32 to vector<8x16xf32>
    %28 = arith.select %26, %10, %27 : vector<8x16xi1>, vector<8x16xf32>
    %cst_11 = arith.constant dense<0.000000e+00> : vector<8xf32>
    %29 = vector.multi_reduction <add>, %28, %cst_11 [1] : vector<8x16xf32> to vector<8xf32>
    %30 = vector.shape_cast %29 : vector<8xf32> to vector<8x1xf32>
    %cst_12 = arith.constant dense<0xFF800000> : vector<8xf32>
    %31 = vector.multi_reduction <maximumf>, %10, %cst_12 [1] : vector<8x16xf32> to vector<8xf32>
    %32 = vector.shape_cast %31 : vector<8xf32> to vector<8x1xf32>
    %33 = arith.maximumf %32, %30 : vector<8x1xf32>
    %cst_13 = arith.constant dense<0xFF800000> : vector<8xf32>
    %34 = vector.multi_reduction <maximumf>, %13, %cst_13 [1] : vector<8x16xf32> to vector<8xf32>
    %35 = vector.shape_cast %34 : vector<8xf32> to vector<8x1xf32>
    %36 = arith.maximumf %35, %30 : vector<8x1xf32>
    %37 = vector.broadcast %33 : vector<8x1xf32> to vector<8x16xf32>
    %38 = arith.subf %10, %37 : vector<8x16xf32>
    %39 = math.exp %38 : vector<8x16xf32>
    %cst_14 = arith.constant 0.000000e+00 : f32
    %40 = vector.broadcast %cst_14 : f32 to vector<8x16xf32>
    %41 = arith.select %23, %39, %40 : vector<8x16xi1>, vector<8x16xf32>
    %cst_15 = arith.constant dense<0.000000e+00> : vector<8xf32>
    %42 = vector.multi_reduction <add>, %41, %cst_15 [1] : vector<8x16xf32> to vector<8xf32>
    %43 = vector.shape_cast %42 : vector<8xf32> to vector<8x1xf32>
    %44 = vector.broadcast %36 : vector<8x1xf32> to vector<8x16xf32>
    %45 = arith.subf %13, %44 : vector<8x16xf32>
    %46 = math.exp %45 : vector<8x16xf32>
    %cst_16 = arith.constant 0.000000e+00 : f32
    %47 = vector.broadcast %cst_16 : f32 to vector<8x16xf32>
    %48 = arith.select %23, %46, %47 : vector<8x16xi1>, vector<8x16xf32>
    %cst_17 = arith.constant dense<0.000000e+00> : vector<8xf32>
    %49 = vector.multi_reduction <add>, %48, %cst_17 [1] : vector<8x16xf32> to vector<8xf32>
    %50 = vector.shape_cast %49 : vector<8xf32> to vector<8x1xf32>
    %51 = arith.subf %30, %33 : vector<8x1xf32>
    %52 = math.exp %51 : vector<8x1xf32>
    %53 = arith.subf %30, %36 : vector<8x1xf32>
    %54 = math.exp %53 : vector<8x1xf32>
    %55 = arith.addf %52, %43 : vector<8x1xf32>
    %56 = math.log %55 : vector<8x1xf32>
    %57 = arith.addf %56, %33 : vector<8x1xf32>
    %58 = arith.subf %57, %30 : vector<8x1xf32>
    %59 = arith.addf %54, %50 : vector<8x1xf32>
    %60 = math.log %59 : vector<8x1xf32>
    %61 = arith.addf %60, %36 : vector<8x1xf32>
    %62 = arith.subf %61, %30 : vector<8x1xf32>
    %c0_18 = arith.constant 0 : index
    %c0_19 = arith.constant 0 : index
    %63 = vector.load %arg2[%c0_18, %c0_19] : memref<8x2xf32, #tpu.memory_space<vmem>>, vector<8x1xf32>
    tpu.vector_store %arg2[%c0_18, %c0_19], %58 {strides = array<i32>} : memref<8x2xf32, #tpu.memory_space<vmem>>, vector<8x1xf32>,
    %c0_20 = arith.constant 0 : index
    %c1 = arith.constant 1 : index
    %64 = vector.load %arg2[%c0_20, %c1] : memref<8x2xf32, #tpu.memory_space<vmem>>, vector<8x1xf32>
    tpu.vector_store %arg2[%c0_20, %c1], %62 {strides = array<i32>} : memref<8x2xf32, #tpu.memory_space<vmem>>, vector<8x1xf32>,
    return
  }
  func.func @transform_0(%arg0: i32) -> (i32, i32) {
    %c0_i32 = arith.constant 0 : i32
    %c0_i32_0 = arith.constant 0 : i32
    %c0_i32_1 = arith.constant 0 : i32
    return %c0_i32, %c0_i32_0 : i32, i32
  }
  func.func @transform_1(%arg0: i32) -> (i32, i32) {
    %c0_i32 = arith.constant 0 : i32
    %c0_i32_0 = arith.constant 0 : i32
    return %arg0, %c0_i32 : i32, i32
  }
}

module attributes {stable_mosaic.version = 11 : i64} {
  func.func @_sscl_kernel(%arg0: i32, %arg1: memref<16x32xf32, #tpu.memory_space<vmem>>, %arg2: memref<8x2xf32, #tpu.memory_space<vmem>>) attributes {dimension_semantics = [#tpu.dimension_semantics<parallel>], iteration_bounds = array<i64: 1>, scalar_prefetch = 0 : i64, scratch_operands = 0 : i64, tpu.core_type = #tpu.core_type<tc>, window_params = [{pipeline_mode = #tpu.pipeline_mode<synchronous>, transform_indices = @transform_0, window_bounds = array<i64: 16, 32>}, {transform_indices = @transform_1, window_bounds = array<i64: 8, 2>}]} {
    %c8_i32 = arith.constant 8 : i32
    %0 = arith.muli %arg0, %c8_i32 : i32
    %1 = tpu.assume_multiple %0, 8 : i32
    %c0 = arith.constant 0 : index
    %c0_0 = arith.constant 0 : index
    %2 = vector.load %arg1[%c0, %c0_0] : memref<16x32xf32, #tpu.memory_space<vmem>>, vector<16x32xf32>
    %3 = arith.index_cast %1 : i32 to index
    %c0_1 = arith.constant 0 : index
    %4 = vector.load %arg1[%3, %c0_1] : memref<16x32xf32, #tpu.memory_space<vmem>>, vector<8x32xf32>
    %c8_i32_2 = arith.constant 8 : i32
    %5 = arith.addi %c8_i32_2, %1 : i32
    %6 = arith.index_cast %5 : i32 to index
    %c0_3 = arith.constant 0 : index
    %7 = vector.load %arg1[%6, %c0_3] : memref<16x32xf32, #tpu.memory_space<vmem>>, vector<8x32xf32>
    %cst = arith.constant dense<0.000000e+00> : vector<8x16xf32>
    %8 = tpu.matmul %4, %2, %cst {dimension_numbers = #tpu.dot_dimension_numbers<[1], [1], [0], [0], [0, 0, 1, 0], [], []>} : vector<8x32xf32>, vector<16x32xf32>, vector<8x16xf32> -> vector<8x16xf32>
    %cst_4 = arith.constant 2.000000e+01 : f32
    %9 = vector.broadcast %cst_4 : f32 to vector<8x16xf32>
    %10 = arith.mulf %8, %9 : vector<8x16xf32>
    %cst_5 = arith.constant dense<0.000000e+00> : vector<8x16xf32>
    %11 = tpu.matmul %7, %2, %cst_5 {dimension_numbers = #tpu.dot_dimension_numbers<[1], [1], [0], [0], [0, 0, 1, 0], [], []>} : vector<8x32xf32>, vector<16x32xf32>, vector<8x16xf32> -> vector<8x16xf32>
    %cst_6 = arith.constant 2.000000e+01 : f32
    %12 = vector.broadcast %cst_6 : f32 to vector<8x16xf32>
    %13 = arith.mulf %11, %12 : vector<8x16xf32>
    %14 = tpu.iota {dimensions = array<i32: 1>} : vector<8x16xi32>
    %15 = tpu.iota {dimensions = array<i32: 0>} : vector<8x16xi32>
    %16 = vector.broadcast %1 : i32 to vector<8x16xi32>
    %17 = arith.addi %15, %16 : vector<8x16xi32>
    %18 = arith.cmpi eq, %14, %17 : vector<8x16xi32>
    %c8_i32_7 = arith.constant 8 : i32
    %19 = vector.broadcast %c8_i32_7 : i32 to vector<8x16xi32>
    %20 = arith.addi %17, %19 : vector<8x16xi32>
    %21 = arith.cmpi eq, %14, %20 : vector<8x16xi32>
    %22 = arith.ori %18, %21 : vector<8x16xi1>
    %cst_8 = arith.constant dense<true> : vector<8x16xi1>
    %23 = arith.xori %22, %cst_8 : vector<8x16xi1>
    %c8_i32_9 = arith.constant 8 : i32
    %24 = vector.broadcast %c8_i32_9 : i32 to vector<8x16xi32>
    %25 = arith.addi %17, %24 : vector<8x16xi32>
    %26 = arith.cmpi eq, %14, %25 : vector<8x16xi32>
    %cst_10 = arith.constant 0.000000e+00 : f32
    %27 = vector.broadcast %cst_10 : f32 to vector<8x16xf32>
    %28 = arith.select %26, %10, %27 : vector<8x16xi1>, vector<8x16xf32>
    %cst_11 = arith.constant dense<0.000000e+00> : vector<8xf32>
    %29 = vector.multi_reduction <add>, %28, %cst_11 [1] : vector<8x16xf32> to vector<8xf32>
    %30 = vector.shape_cast %29 : vector<8xf32> to vector<8x1xf32>
    %cst_12 = arith.constant dense<0xFF800000> : vector<8xf32>
    %31 = vector.multi_reduction <maximumf>, %10, %cst_12 [1] : vector<8x16xf32> to vector<8xf32>
    %32 = vector.shape_cast %31 : vector<8xf32> to vector<8x1xf32>
    %33 = arith.maximumf %32, %30 : vector<8x1xf32>
    %cst_13 = arith.constant dense<0xFF800000> : vector<8xf32>
    %34 = vector.multi_reduction <maximumf>, %13, %cst_13 [1] : vector<8x16xf32> to vector<8xf32>
    %35 = vector.shape_cast %34 : vector<8xf32> to vector<8x1xf32>
    %36 = arith.maximumf %35, %30 : vector<8x1xf32>
    %37 = vector.broadcast %33 : vector<8x1xf32> to vector<8x16xf32>
    %38 = arith.subf %10, %37 : vector<8x16xf32>
    %39 = math.exp %38 : vector<8x16xf32>
    %cst_14 = arith.constant 0.000000e+00 : f32
    %40 = vector.broadcast %cst_14 : f32 to vector<8x16xf32>
    %41 = arith.select %23, %39, %40 : vector<8x16xi1>, vector<8x16xf32>
    %cst_15 = arith.constant dense<0.000000e+00> : vector<8xf32>
    %42 = vector.multi_reduction <add>, %41, %cst_15 [1] : vector<8x16xf32> to vector<8xf32>
    %43 = vector.shape_cast %42 : vector<8xf32> to vector<8x1xf32>
    %44 = vector.broadcast %36 : vector<8x1xf32> to vector<8x16xf32>
    %45 = arith.subf %13, %44 : vector<8x16xf32>
    %46 = math.exp %45 : vector<8x16xf32>
    %cst_16 = arith.constant 0.000000e+00 : f32
    %47 = vector.broadcast %cst_16 : f32 to vector<8x16xf32>
    %48 = arith.select %23, %46, %47 : vector<8x16xi1>, vector<8x16xf32>
    %cst_17 = arith.constant dense<0.000000e+00> : vector<8xf32>
    %49 = vector.multi_reduction <add>, %48, %cst_17 [1] : vector<8x16xf32> to vector<8xf32>
    %50 = vector.shape_cast %49 : vector<8xf32> to vector<8x1xf32>
    %51 = arith.subf %30, %33 : vector<8x1xf32>
    %52 = math.exp %51 : vector<8x1xf32>
    %53 = arith.subf %30, %36 : vector<8x1xf32>
    %54 = math.exp %53 : vector<8x1xf32>
    %55 = arith.addf %52, %43 : vector<8x1xf32>
    %56 = math.log %55 : vector<8x1xf32>
    %57 = arith.addf %56, %33 : vector<8x1xf32>
    %58 = arith.subf %57, %30 : vector<8x1xf32>
    %59 = arith.addf %54, %50 : vector<8x1xf32>
    %60 = math.log %59 : vector<8x1xf32>
    %61 = arith.addf %60, %36 : vector<8x1xf32>
    %62 = arith.subf %61, %30 : vector<8x1xf32>
    %c0_18 = arith.constant 0 : index
    %c0_19 = arith.constant 0 : index
    %63 = vector.load %arg2[%c0_18, %c0_19] : memref<8x2xf32, #tpu.memory_space<vmem>>, vector<8x1xf32>
    tpu.vector_store %arg2[%c0_18, %c0_19], %58 {strides = array<i32>} : memref<8x2xf32, #tpu.memory_space<vmem>>, vector<8x1xf32>,
    %c0_20 = arith.constant 0 : index
    %c1 = arith.constant 1 : index
    %64 = vector.load %arg2[%c0_20, %c1] : memref<8x2xf32, #tpu.memory_space<vmem>>, vector<8x1xf32>
    tpu.vector_store %arg2[%c0_20, %c1], %62 {strides = array<i32>} : memref<8x2xf32, #tpu.memory_space<vmem>>, vector<8x1xf32>,
    return
  }
  func.func @transform_0(%arg0: i32) -> (i32, i32) {
    %c0_i32 = arith.constant 0 : i32
    %c0_i32_0 = arith.constant 0 : i32
    %c0_i32_1 = arith.constant 0 : i32
    return %c0_i32, %c0_i32_0 : i32, i32
  }
  func.func @transform_1(%arg0: i32) -> (i32, i32) {
    %c0_i32 = arith.constant 0 : i32
    %c0_i32_0 = arith.constant 0 : i32
    return %arg0, %c0_i32 : i32, i32
  }
}

</mosaic_0001>

<llo_original>
// kernel: tpu_custom_call.1
$region0: #{tpu_custom_call.1}
  #allocation0 [shape = 'u32[]', space=smem, size = 0x4, offset = 0x4, fixed_abs, tag = 'smem constant byte address 0x4 - core index']
  #allocation1 [shape = 'u32[72,128]{1,0:T(1,128)}', space=vmem, size = 0x9000, scoped, tag = 'internal scratch']
  %s0 = inlined_call_operand.hbm [shape: f32[16,32], index: 0, kind: input, shape index: {}]
  %s1 = inlined_call_operand.vmem [shape: f32[8,2], index: 1, kind: output, shape index: {}]
  %s2 = sld [smem:[#allocation0]]
  $region18: #{tpu_custom_call.1} parent=0
    _
  %s4 = ssub.s32 1, %s2
  %s5 = scalar_select 0, %s4, %s2
  $region1: #{tpu_custom_call.1} parent=0
    #allocation2 [shape = 'u8[8192]{0}', space=vmem, size = 0x2000, scoped, tag = 'input window, operand 0, single buffered']
    #allocation3 [shape = 's32[1]{0}', space=sflag, size = 0x4, scoped, tag = 'scoped memory for tpu_custom_call.1']
    %6 = vsyncpa [#allocation3], 0
    // Predicated region
    $region2: #{tpu_custom_call.1} parent=1 // pred_check
      _
    $region3: #{tpu_custom_call.1} parent=1 // pred_check_branch
      %8 = sbr.rel (0) target = $region5
    $region4: #{tpu_custom_call.1} parent=1 // pred_region
      %10 = vsyncadd [#allocation3], 0
      %s11 = sshll.u32 %s0, 4
      %s12 = int_to_ptr.hbm [resolvable:$true] %s11
      %s13 = sshll.u32 [#allocation2], 4
      %s14 = int_to_ptr.vmem [resolvable:$true] %s13
      %19 = dma.hbm_to_vmem [thread:$0]  %s12, 256, %s14, [#allocation3], 128, 128, 8
    $region5: #{tpu_custom_call.1} parent=1 // pred_fallthru
      _
    // Predicated region
    $region6: #{tpu_custom_call.1} parent=1 // pred_check
      _
    $region7: #{tpu_custom_call.1} parent=1 // pred_check_branch
      %21 = sbr.rel (0) target = $region9
    $region8: #{tpu_custom_call.1} parent=1 // pred_region
      %23 = dma.done [#allocation3], 256
    $region9: #{tpu_custom_call.1} parent=1 // pred_fallthru
      _
    %s24 = smul.u32 0, 8
    %v25 = vld [vmem:[#allocation2] sm:$0xff]
    %v26 = vld [vmem:[#allocation2 + $0x8] sm:$0xff]
    %s27 = scalar_lea.vmem [#allocation2], %s24
    %v28 = vld [vmem:[%s27] sm:$0xff]
    %s29 = sadd.s32 %s24, 8
    %s30 = scalar_lea.vmem [#allocation2], %s29
    %v31 = vld [vmem:[%s30] sm:$0xff]
    %vm32 = vcmask 261120
    %v34 = vsel %vm32, %v28, 0
    %v37 = vsel %vm32, %v25, 0
    %v40 = vsel %vm32, %v26, 0
    %42 = vmatpush.xpose.msra.mxu0 0.0
    %43 = vmatpush.xpose.msra.mxu0 0.0
    %44 = vmatpush.xpose.msra.mxu0 0.0
    %45 = vmatpush.xpose.msra.mxu0 0.0
    %46 = vmatpush.xpose.msra.mxu0 0.0
    %47 = vmatpush.xpose.msra.mxu0 0.0
    %48 = vmatpush.xpose.msra.mxu0 0.0
    %49 = vmatpush.xpose.msra.mxu0 0.0
    %50 = vmatpush.xpose.msra.mxu0 0.0
    %51 = vmatpush.xpose.msra.mxu0 0.0
    %52 = vmatpush.xpose.msra.mxu0 0.0
    %53 = vmatpush.xpose.msra.mxu0 0.0
    %54 = vmatpush.xpose.msra.mxu0 0.0
    %55 = vmatpush.xpose.msra.mxu0 0.0
    %56 = vmatpush.xpose.msra.mxu0 %v40
    %57 = vmatpush.xpose.msra.mxu0 %v37
    %58 = vmatmul.f32.gmra.mxu0 %v34
    %v59 = vpop.f32.mrf.mxu0
    %v60 = vadd.f32 0.0, %v59
    %61 = vdwg.mxu0
    %v62 = vmul.f32 %v60, 20.0
    %v64 = vsel %vm32, %v31, 0
    %66 = vmatpush.xpose.msra.mxu0 0.0
    %67 = vmatpush.xpose.msra.mxu0 0.0
    %68 = vmatpush.xpose.msra.mxu0 0.0
    %69 = vmatpush.xpose.msra.mxu0 0.0
    %70 = vmatpush.xpose.msra.mxu0 0.0
    %71 = vmatpush.xpose.msra.mxu0 0.0
    %72 = vmatpush.xpose.msra.mxu0 0.0
    %73 = vmatpush.xpose.msra.mxu0 0.0
    %74 = vmatpush.xpose.msra.mxu0 0.0
    %75 = vmatpush.xpose.msra.mxu0 0.0
    %76 = vmatpush.xpose.msra.mxu0 0.0
    %77 = vmatpush.xpose.msra.mxu0 0.0
    %78 = vmatpush.xpose.msra.mxu0 0.0
    %79 = vmatpush.xpose.msra.mxu0 0.0
    %80 = vmatpush.xpose.msra.mxu0 %v40
    %81 = vmatpush.xpose.msra.mxu0 %v37
    %82 = vmatmul.f32.gmra.mxu0 %v64
    %v83 = vpop.f32.mrf.mxu0
    %v84 = vadd.f32 0.0, %v83
    %85 = vdwg.mxu0
    %v86 = vmul.f32 %v84, 20.0
    %v87 = vlaneseq
    %v88 = vand.u32 %v87, 127
    %v89 = vlaneseq
    %v90 = vshrl.u32 %v89, 7
    %v91 = vstv %s24
    %v92 = vadd.s32 %v90, %v91
    %vm93 = vcmp.eq.s32.totalorder %v88, %v92
    %v94 = vadd.s32 %v92, 8
    %vm95 = vcmp.eq.s32.totalorder %v88, %v94
    %vm96 = vmor %vm93, %vm95
    %vm97 = vmxor %vm96, 1
    %v98 = vsel %vm95, %v62, 0.0
    %vm99 = vcmask 130048
    %v100 = vsel %vm99, %v98, 0.0
    %101 = vadd.xlane.f32.xlu0 %v100
    %v102 = vpop.xlane.xlu0 %101
    %v103 = vsel %vm99, %v62, -inf
    %104 = vmax.xlane.f32.xlu0 %v103
    %v105 = vpop.xlane.xlu0 %104
    %v106 = vmax.f32 %v105, %v102
    %v107 = vsel %vm99, %v86, -inf
    %108 = vmax.xlane.f32.xlu0 %v107
    %v109 = vpop.xlane.xlu0 %108
    %v110 = vmax.f32 %v109, %v102
    %v111 = vsub.f32 %v62, %v106
    %v112 = vmul.f32 %v111, 1.442695
    %v113 = vpow.pop %v112
    %v114 = vsel %vm97, %v113, 0.0
    %v115 = vsel %vm99, %v114, 0.0
    %116 = vadd.xlane.f32.xlu0 %v115
    %v117 = vpop.xlane.xlu0 %116
    %v118 = vsub.f32 %v86, %v110
    %v119 = vmul.f32 %v118, 1.442695
    %v120 = vpow.pop %v119
    %v121 = vsel %vm97, %v120, 0.0
    %v122 = vsel %vm99, %v121, 0.0
    %123 = vadd.xlane.f32.xlu0 %v122
    %v124 = vpop.xlane.xlu0 %123
    %v125 = vsub.f32 %v102, %v106
    %v126 = vmul.f32 %v125, 1.442695
    %v127 = vpow.pop %v126
    %v128 = vsub.f32 %v102, %v110
    %v129 = vmul.f32 %v128, 1.442695
    %v130 = vpow.pop %v129
    %v131 = vadd.f32 %v127, %v117
    %v132 = vlog2.pop %v131
    %v133 = vmul.f32 %v132, 0.6931472
    %v134 = vadd.f32 %v133, %v106
    %v135 = vsub.f32 %v134, %v102
    %v136 = vadd.f32 %v130, %v124
    %v137 = vlog2.pop %v136
    %v138 = vmul.f32 %v137, 0.6931472
    %v139 = vadd.f32 %v138, %v110
    %v140 = vsub.f32 %v139, %v102
    %vm141 = vcmask 7168
    %142 = vst.msk [vmem:[%s1] sm:$0xff] %vm141, %v135
    %vm143 = vcmask 15368
    %144 = vst.msk [vmem:[%s1] sm:$0xff] %vm143, %v140
    // Predicated region
    $region10: #{tpu_custom_call.1} parent=1 // pred_check
      _
    $region11: #{tpu_custom_call.1} parent=1 // pred_check_branch
      %146 = sbr.rel (0) target = $region13
    $region12: #{tpu_custom_call.1} parent=1 // pred_region
      _
    $region13: #{tpu_custom_call.1} parent=1 // pred_fallthru
      _
    // Predicated region
    $region14: #{tpu_custom_call.1} parent=1 // pred_check
      _
    $region15: #{tpu_custom_call.1} parent=1 // pred_check_branch
      %148 = sbr.rel (0) target = $region17
    $region16: #{tpu_custom_call.1} parent=1 // pred_region
      _
    $region17: #{tpu_custom_call.1} parent=1 // pred_fallthru
      _
    %149 = vsyncpa [#allocation3], 1

// kernel: tpu_custom_call.1
$region0: #{tpu_custom_call.1}
  #allocation0 [shape = 'u32[]', space=smem, size = 0x4, offset = 0x4, fixed_abs, tag = 'smem constant byte address 0x4 - core index']
  #allocation1 [shape = 'u32[72,128]{1,0:T(1,128)}', space=vmem, size = 0x9000, scoped, tag = 'internal scratch']
  %s0 = inlined_call_operand.hbm [shape: f32[16,32], index: 0, kind: input, shape index: {}]
  %s1 = inlined_call_operand.vmem [shape: f32[8,2], index: 1, kind: output, shape index: {}]
  %s2 = sld [smem:[#allocation0]]
  $region18: #{tpu_custom_call.1} parent=0
    _
  %s4 = ssub.s32 1, %s2
  %s5 = scalar_select 0, %s4, %s2
  $region1: #{tpu_custom_call.1} parent=0
    #allocation2 [shape = 'u8[8192]{0}', space=vmem, size = 0x2000, scoped, tag = 'input window, operand 0, single buffered']
    #allocation3 [shape = 's32[1]{0}', space=sflag, size = 0x4, scoped, tag = 'scoped memory for tpu_custom_call.1']
    %6 = vsyncpa [#allocation3], 0
    // Predicated region
    $region2: #{tpu_custom_call.1} parent=1 // pred_check
      _
    $region3: #{tpu_custom_call.1} parent=1 // pred_check_branch
      %8 = sbr.rel (0) target = $region5
    $region4: #{tpu_custom_call.1} parent=1 // pred_region
      %10 = vsyncadd [#allocation3], 0
      %s11 = sshll.u32 %s0, 4
      %s12 = int_to_ptr.hbm [resolvable:$true] %s11
      %s13 = sshll.u32 [#allocation2], 4
      %s14 = int_to_ptr.vmem [resolvable:$true] %s13
      %19 = dma.hbm_to_vmem [thread:$0]  %s12, 256, %s14, [#allocation3], 128, 128, 8
    $region5: #{tpu_custom_call.1} parent=1 // pred_fallthru
      _
    // Predicated region
    $region6: #{tpu_custom_call.1} parent=1 // pred_check
      _
    $region7: #{tpu_custom_call.1} parent=1 // pred_check_branch
      %21 = sbr.rel (0) target = $region9
    $region8: #{tpu_custom_call.1} parent=1 // pred_region
      %23 = dma.done [#allocation3], 256
    $region9: #{tpu_custom_call.1} parent=1 // pred_fallthru
      _
    %s24 = smul.u32 0, 8
    %v25 = vld [vmem:[#allocation2] sm:$0xff]
    %v26 = vld [vmem:[#allocation2 + $0x8] sm:$0xff]
    %s27 = scalar_lea.vmem [#allocation2], %s24
    %v28 = vld [vmem:[%s27] sm:$0xff]
    %s29 = sadd.s32 %s24, 8
    %s30 = scalar_lea.vmem [#allocation2], %s29
    %v31 = vld [vmem:[%s30] sm:$0xff]
    %vm32 = vcmask 261120
    %v34 = vsel %vm32, %v28, 0
    %v37 = vsel %vm32, %v25, 0
    %v40 = vsel %vm32, %v26, 0
    %42 = vmatpush.xpose.msra.mxu0 0.0
    %43 = vmatpush.xpose.msra.mxu0 0.0
    %44 = vmatpush.xpose.msra.mxu0 0.0
    %45 = vmatpush.xpose.msra.mxu0 0.0
    %46 = vmatpush.xpose.msra.mxu0 0.0
    %47 = vmatpush.xpose.msra.mxu0 0.0
    %48 = vmatpush.xpose.msra.mxu0 0.0
    %49 = vmatpush.xpose.msra.mxu0 0.0
    %50 = vmatpush.xpose.msra.mxu0 0.0
    %51 = vmatpush.xpose.msra.mxu0 0.0
    %52 = vmatpush.xpose.msra.mxu0 0.0
    %53 = vmatpush.xpose.msra.mxu0 0.0
    %54 = vmatpush.xpose.msra.mxu0 0.0
    %55 = vmatpush.xpose.msra.mxu0 0.0
    %56 = vmatpush.xpose.msra.mxu0 %v40
    %57 = vmatpush.xpose.msra.mxu0 %v37
    %58 = vmatmul.f32.gmra.mxu0 %v34
    %v59 = vpop.f32.mrf.mxu0
    %v60 = vadd.f32 0.0, %v59
    %61 = vdwg.mxu0
    %v62 = vmul.f32 %v60, 20.0
    %v64 = vsel %vm32, %v31, 0
    %66 = vmatpush.xpose.msra.mxu0 0.0
    %67 = vmatpush.xpose.msra.mxu0 0.0
    %68 = vmatpush.xpose.msra.mxu0 0.0
    %69 = vmatpush.xpose.msra.mxu0 0.0
    %70 = vmatpush.xpose.msra.mxu0 0.0
    %71 = vmatpush.xpose.msra.mxu0 0.0
    %72 = vmatpush.xpose.msra.mxu0 0.0
    %73 = vmatpush.xpose.msra.mxu0 0.0
    %74 = vmatpush.xpose.msra.mxu0 0.0
    %75 = vmatpush.xpose.msra.mxu0 0.0
    %76 = vmatpush.xpose.msra.mxu0 0.0
    %77 = vmatpush.xpose.msra.mxu0 0.0
    %78 = vmatpush.xpose.msra.mxu0 0.0
    %79 = vmatpush.xpose.msra.mxu0 0.0
    %80 = vmatpush.xpose.msra.mxu0 %v40
    %81 = vmatpush.xpose.msra.mxu0 %v37
    %82 = vmatmul.f32.gmra.mxu0 %v64
    %v83 = vpop.f32.mrf.mxu0
    %v84 = vadd.f32 0.0, %v83
    %85 = vdwg.mxu0
    %v86 = vmul.f32 %v84, 20.0
    %v87 = vlaneseq
    %v88 = vand.u32 %v87, 127
    %v89 = vlaneseq
    %v90 = vshrl.u32 %v89, 7
    %v91 = vstv %s24
    %v92 = vadd.s32 %v90, %v91
    %vm93 = vcmp.eq.s32.totalorder %v88, %v92
    %v94 = vadd.s32 %v92, 8
    %vm95 = vcmp.eq.s32.totalorder %v88, %v94
    %vm96 = vmor %vm93, %vm95
    %vm97 = vmxor %vm96, 1
    %v98 = vsel %vm95, %v62, 0.0
    %vm99 = vcmask 130048
    %v100 = vsel %vm99, %v98, 0.0
    %101 = vadd.xlane.f32.xlu0 %v100
    %v102 = vpop.xlane.xlu0 %101
    %v103 = vsel %vm99, %v62, -inf
    %104 = vmax.xlane.f32.xlu0 %v103
    %v105 = vpop.xlane.xlu0 %104
    %v106 = vmax.f32 %v105, %v102
    %v107 = vsel %vm99, %v86, -inf
    %108 = vmax.xlane.f32.xlu0 %v107
    %v109 = vpop.xlane.xlu0 %108
    %v110 = vmax.f32 %v109, %v102
    %v111 = vsub.f32 %v62, %v106
    %v112 = vmul.f32 %v111, 1.442695
    %v113 = vpow.pop %v112
    %v114 = vsel %vm97, %v113, 0.0
    %v115 = vsel %vm99, %v114, 0.0
    %116 = vadd.xlane.f32.xlu0 %v115
    %v117 = vpop.xlane.xlu0 %116
    %v118 = vsub.f32 %v86, %v110
    %v119 = vmul.f32 %v118, 1.442695
    %v120 = vpow.pop %v119
    %v121 = vsel %vm97, %v120, 0.0
    %v122 = vsel %vm99, %v121, 0.0
    %123 = vadd.xlane.f32.xlu0 %v122
    %v124 = vpop.xlane.xlu0 %123
    %v125 = vsub.f32 %v102, %v106
    %v126 = vmul.f32 %v125, 1.442695
    %v127 = vpow.pop %v126
    %v128 = vsub.f32 %v102, %v110
    %v129 = vmul.f32 %v128, 1.442695
    %v130 = vpow.pop %v129
    %v131 = vadd.f32 %v127, %v117
    %v132 = vlog2.pop %v131
    %v133 = vmul.f32 %v132, 0.6931472
    %v134 = vadd.f32 %v133, %v106
    %v135 = vsub.f32 %v134, %v102
    %v136 = vadd.f32 %v130, %v124
    %v137 = vlog2.pop %v136
    %v138 = vmul.f32 %v137, 0.6931472
    %v139 = vadd.f32 %v138, %v110
    %v140 = vsub.f32 %v139, %v102
    %vm141 = vcmask 7168
    %142 = vst.msk [vmem:[%s1] sm:$0xff] %vm141, %v135
    %vm143 = vcmask 15368
    %144 = vst.msk [vmem:[%s1] sm:$0xff] %vm143, %v140
    // Predicated region
    $region10: #{tpu_custom_call.1} parent=1 // pred_check
      _
    $region11: #{tpu_custom_call.1} parent=1 // pred_check_branch
      %146 = sbr.rel (0) target = $region13
    $region12: #{tpu_custom_call.1} parent=1 // pred_region
      _
    $region13: #{tpu_custom_call.1} parent=1 // pred_fallthru
      _
    // Predicated region
    $region14: #{tpu_custom_call.1} parent=1 // pred_check
      _
    $region15: #{tpu_custom_call.1} parent=1 // pred_check_branch
      %148 = sbr.rel (0) target = $region17
    $region16: #{tpu_custom_call.1} parent=1 // pred_region
      _
    $region17: #{tpu_custom_call.1} parent=1 // pred_fallthru
      _
    %149 = vsyncpa [#allocation3], 1

</llo_original>
